<compile_context>
chip_gen: v5e
topology: v5e:2x2
jax: 0.10.0
libtpu: 0.0.40
codegen_flags: <defaults>
</compile_context>

<pallas_src>
import functools

import jax
import jax.numpy as jnp
from jax import lax
from jax.experimental import pallas as pl
from jax.experimental.pallas import tpu as pltpu


def _sample_kernel_vpu(x_ref, u_ref, act_ref, *, temperature, num_actions):
    """Small-A path.  x_ref: (TB, A) logits; u_ref: (1, TB); act_ref: (1, TB) int32."""
    A = num_actions
    x = x_ref[...].astype(jnp.float32) * temperature              # (TB, A)
    m = jnp.max(x, axis=-1, keepdims=True)                         # (TB, 1)
    e = jnp.exp(x - m)                                             # (TB, A)

    # tri[j, k] = 1 iff k <= j  (inclusive prefix-sum weights, built in-kernel: tiny).
    j_idx = lax.broadcasted_iota(jnp.int32, (A, A), 0)
    k_idx = lax.broadcasted_iota(jnp.int32, (A, A), 1)
    tri = (k_idx <= j_idx).astype(jnp.float32)                     # (A, A)

    # Transposed unnormalized CDF: cum_t[j, b] = sum_k tri[j, k] * e[b, k].
    # Pure VPU mul + minor-axis reduce; no MXU, no transposes anywhere.
    cum_t = jnp.sum(tri[:, None, :] * e[None, :, :], axis=-1)      # (A, TB)

    # No divide: cdf_j < u  <=>  cum_j < u * denom.  denom = last prefix (consistent
    # accumulation order with cum_t, so count < A is guaranteed for u in [0, 1)).
    denom_t = cum_t[A - 1:A, :]                                     # (1, TB)
    thresh_t = u_ref[...].astype(jnp.float32) * denom_t            # (1, TB)

    count_t = jnp.sum((cum_t < thresh_t).astype(jnp.int32),
                      axis=0, keepdims=True)                        # (1, TB) lane-dense
    act_ref[...] = jnp.minimum(count_t, A - 1)                      # defensive clamp


def _sample_kernel_mxu(x_ref, u_ref, tri_ref, act_ref, *, temperature, num_actions):
    """Large-A path.  x_ref: (TB, A); u_ref: (TB, 1); tri_ref: (A, A) resident;
    act_ref: (1, TB) int32."""
    A = num_actions
    x = x_ref[...].astype(jnp.float32) * temperature                # (TB, A)
    m = jnp.max(x, axis=-1, keepdims=True)
    e = jnp.exp(x - m)                                               # (TB, A) f32

    tri = tri_ref[...]                                               # (A, A), bf16/f32, DMA'd once
    cum = jnp.dot(e.astype(tri.dtype), tri,
                  preferred_element_type=jnp.float32)                # (TB, A) f32 accum

    denom = cum[:, A - 1:A]                                          # (TB, 1), MXU-consistent
    thresh = u_ref[...].astype(jnp.float32) * denom                  # (TB, 1)
    ind = (cum < thresh).astype(jnp.float32)                         # (TB, A)

    # Lane-dense count without a (TB,1)->(1,TB) relayout: ones(1,A) . ind^T via an
    # NT dot_general (contract both last axes) -> (1, TB).
    ones_row = jnp.ones((1, A), jnp.float32)
    count = lax.dot_general(ones_row, ind, (((1,), (1,)), ((), ())),
                            preferred_element_type=jnp.float32)      # (1, TB)
    act_ref[...] = jnp.minimum(count.astype(jnp.int32), A - 1)       # defensive clamp


def softmax_body(outputs, uniforms, temperature, *, batch_tile=None, use_bf16_tri=True):
    """outputs: (B, A) logits (any float dtype); uniforms: (B,)/(B,1) in [0,1).
    Returns (B, 1) int32 sampled action indices."""
    B, A = outputs.shape
    u_flat = uniforms.reshape(B)          # free metadata reshape of a contiguous buffer
    use_vpu = A <= 32                     # SMB-style action sets live here

    # Tile sizing: keep per-step VMEM (incl. the lane-padded broadcast temporaries on
    # the VPU path / f32 temps + double-buffered logits on the MXU path) ~<= 12 MiB so
    # v5e's 16 MiB default and v7x's 32 MiB-of-64 MiB scoped VMEM are both comfortable.
    if batch_tile is None:
        if use_vpu:
            cap = (6 * 1024 * 1024) // (A * 128 * 4)
        else:
            cap = (8 * 1024 * 1024) // (A * 4 * 6)
        batch_tile = max(128, min(1024, cap))
    if B <= batch_tile:
        tb = B                             # single full block: no (8,128) divisibility needed
    else:
        tb = max(128, (batch_tile // 128) * 128)   # multiple of 128 -> lane-dense (1,tb) blocks OK

    cparams = pltpu.CompilerParams(
        dimension_semantics=("parallel",),           # v7x: consider pltpu.CORE_PARALLEL
        vmem_limit_bytes=32 * 1024 * 1024,
    )
    out_shape = jax.ShapeDtypeStruct((1, B), jnp.int32)     # lane-dense action row
    out_spec = pl.BlockSpec((1, tb), lambda i: (0, i))
    grid = (pl.cdiv(B, tb),)

    if use_vpu:
        kernel = functools.partial(_sample_kernel_vpu,
                                   temperature=float(temperature), num_actions=A)
        out = pl.pallas_call(
            kernel,
            out_shape=out_shape,
            grid_spec=pl.GridSpec(
                grid=grid,
                in_specs=[pl.BlockSpec((tb, A), lambda i: (i, 0)),
                          pl.BlockSpec((1, tb), lambda i: (0, i))],
                out_specs=out_spec),
            compiler_params=cparams,
        )(outputs, u_flat.reshape(1, B))
    else:
        tri_dtype = jnp.bfloat16 if use_bf16_tri else jnp.float32
        kk = lax.broadcasted_iota(jnp.int32, (A, A), 0)
        jj = lax.broadcasted_iota(jnp.int32, (A, A), 1)
        tri = (kk <= jj).astype(tri_dtype)     # hoisted; constant index_map => DMA'd once
        kernel = functools.partial(_sample_kernel_mxu,
                                   temperature=float(temperature), num_actions=A)
        out = pl.pallas_call(
            kernel,
            out_shape=out_shape,
            grid_spec=pl.GridSpec(
                grid=grid,
                in_specs=[pl.BlockSpec((tb, A), lambda i: (i, 0)),
                          pl.BlockSpec((tb, 1), lambda i: (i, 0)),
                          pl.BlockSpec((A, A), lambda i: (0, 0))],
                out_specs=out_spec),
            compiler_params=cparams,
        )(outputs, u_flat.reshape(B, 1), tri)

    return out.reshape(B, 1)


def _reference_actions(outputs, uniforms, T):
    """Pure-JAX inverse-CDF reference using the same (cum < u * denom) formulation."""
    x = outputs * T
    e = jnp.exp(x - jnp.max(x, axis=-1, keepdims=True))
    cum = jnp.cumsum(e, axis=-1)
    A = outputs.shape[-1]
    cnt = jnp.sum((cum < uniforms * cum[:, -1:]).astype(jnp.int32), axis=-1, keepdims=True)
    return jnp.minimum(cnt, A - 1), cum / cum[:, -1:]


if __name__ == "__main__":
    # Module has no learned parameters; only the temperature T from __init__.
    T = 0.5
    key = jax.random.PRNGKey(0)
    k1, k2, k3, k4 = jax.random.split(key, 4)

    # --- Small-A path: the module's actual regime (e.g. SMB action set). ---
    B, A = 8, 16
    outputs = jax.random.normal(k1, (B, A), dtype=jnp.float32)
    uniforms = jax.random.uniform(k2, (B, 1), dtype=jnp.float32)
    actions = jax.block_until_ready(softmax_body(outputs, uniforms, T))

    ref, cdf = _reference_actions(outputs, uniforms, T)
    # Allow disagreement only if u sits within float noise of a CDF boundary
    # (accumulation-order differences between kernel and reference reductions).
    near = jnp.min(jnp.abs(cdf - uniforms), axis=-1, keepdims=True) < 1e-5
    assert actions.shape == (B, 1) and actions.dtype == jnp.int32
    assert bool(jnp.all((actions >= 0) & (actions < A)))
    assert bool(jnp.all((actions == ref) | near))

    # --- Large-A (MXU, hoisted-tri) path; f32 tri here so the exact reference applies
    #     (bf16 tri is the production default per the perf guidance). ---
    B2, A2 = 16, 256
    outputs2 = jax.random.normal(k3, (B2, A2), dtype=jnp.float32)
    uniforms2 = jax.random.uniform(k4, (B2, 1), dtype=jnp.float32)
    actions2 = jax.block_until_ready(
        softmax_body(outputs2, uniforms2, T, use_bf16_tri=False))

    ref2, cdf2 = _reference_actions(outputs2, uniforms2, T)
    near2 = jnp.min(jnp.abs(cdf2 - uniforms2), axis=-1, keepdims=True) < 1e-5
    assert actions2.shape == (B2, 1) and actions2.dtype == jnp.int32
    assert bool(jnp.all((actions2 >= 0) & (actions2 < A2)))
    assert bool(jnp.all((actions2 == ref2) | near2))

    print("KERNEL_OK")
</pallas_src>

<mosaic_0001>
module attributes {stable_mosaic.version = 11 : i64} {
  func.func @_sample_kernel_vpu(%arg0: i32, %arg1: memref<8x16xf32, #tpu.memory_space<vmem>>, %arg2: memref<1x8xf32, #tpu.memory_space<vmem>>, %arg3: memref<1x8xi32, #tpu.memory_space<vmem>>) attributes {dimension_semantics = [#tpu.dimension_semantics<parallel>], iteration_bounds = array<i64: 1>, scalar_prefetch = 0 : i64, scratch_operands = 0 : i64, tpu.core_type = #tpu.core_type<tc>, window_params = [{transform_indices = @transform_0, window_bounds = array<i64: 8, 16>}, {transform_indices = @transform_1, window_bounds = array<i64: 1, 8>}, {transform_indices = @transform_2, window_bounds = array<i64: 1, 8>}]} {
    %c0 = arith.constant 0 : index
    %c0_0 = arith.constant 0 : index
    %0 = vector.load %arg1[%c0, %c0_0] : memref<8x16xf32, #tpu.memory_space<vmem>>, vector<8x16xf32>
    %cst = arith.constant 5.000000e-01 : f32
    %1 = vector.broadcast %cst : f32 to vector<8x16xf32>
    %2 = arith.mulf %0, %1 : vector<8x16xf32>
    %cst_1 = arith.constant dense<0xFF800000> : vector<8xf32>
    %3 = vector.multi_reduction <maximumf>, %2, %cst_1 [1] : vector<8x16xf32> to vector<8xf32>
    %4 = vector.shape_cast %3 : vector<8xf32> to vector<8x1xf32>
    %5 = vector.broadcast %4 : vector<8x1xf32> to vector<8x16xf32>
    %6 = arith.subf %2, %5 : vector<8x16xf32>
    %7 = math.exp %6 : vector<8x16xf32>
    %8 = tpu.iota {dimensions = array<i32: 0>} : vector<16x16xi32>
    %9 = tpu.iota {dimensions = array<i32: 1>} : vector<16x16xi32>
    %10 = arith.cmpi sle, %9, %8 : vector<16x16xi32>
    %11 = arith.extui %10 : vector<16x16xi1> to vector<16x16xi32>
    %12 = arith.sitofp %11 : vector<16x16xi32> to vector<16x16xf32>
    %13 = vector.shape_cast %12 : vector<16x16xf32> to vector<16x1x16xf32>
    %14 = vector.shape_cast %7 : vector<8x16xf32> to vector<1x8x16xf32>
    %15 = vector.broadcast %13 : vector<16x1x16xf32> to vector<16x8x16xf32>
    %16 = vector.broadcast %14 : vector<1x8x16xf32> to vector<16x8x16xf32>
    %17 = arith.mulf %15, %16 : vector<16x8x16xf32>
    %cst_2 = arith.constant dense<0.000000e+00> : vector<16x8xf32>
    %18 = vector.multi_reduction <add>, %17, %cst_2 [2] : vector<16x8x16xf32> to vector<16x8xf32>
    %19 = vector.extract_strided_slice %18 {offsets = [15, 0], sizes = [1, 8], strides = [1, 1]} : vector<16x8xf32> to vector<1x8xf32>
    %c0_3 = arith.constant 0 : index
    %c0_4 = arith.constant 0 : index
    %20 = vector.load %arg2[%c0_3, %c0_4] : memref<1x8xf32, #tpu.memory_space<vmem>>, vector<1x8xf32>
    %21 = arith.mulf %20, %19 : vector<1x8xf32>
    %22 = vector.broadcast %21 : vector<1x8xf32> to vector<16x8xf32>
    %23 = arith.cmpf olt, %18, %22 : vector<16x8xf32>
    %24 = arith.extui %23 : vector<16x8xi1> to vector<16x8xi32>
    %cst_5 = arith.constant dense<0> : vector<8xi32>
    %25 = vector.multi_reduction <add>, %24, %cst_5 [0] : vector<16x8xi32> to vector<8xi32>
    %26 = vector.shape_cast %25 : vector<8xi32> to vector<1x8xi32>
    %c15_i32 = arith.constant 15 : i32
    %27 = vector.broadcast %c15_i32 : i32 to vector<1x8xi32>
    %28 = arith.minsi %26, %27 : vector<1x8xi32>
    %c0_6 = arith.constant 0 : index
    %c0_7 = arith.constant 0 : index
    %29 = vector.load %arg3[%c0_6, %c0_7] : memref<1x8xi32, #tpu.memory_space<vmem>>, vector<1x8xi32>
    tpu.vector_store %arg3[%c0_6, %c0_7], %28 {strides = array<i32>} : memref<1x8xi32, #tpu.memory_space<vmem>>, vector<1x8xi32>,
    return
  }
  func.func @transform_0(%arg0: i32) -> (i32, i32) {
    %c0_i32 = arith.constant 0 : i32
    %c0_i32_0 = arith.constant 0 : i32
    return %arg0, %c0_i32 : i32, i32
  }
  func.func @transform_1(%arg0: i32) -> (i32, i32) {
    %c0_i32 = arith.constant 0 : i32
    %c0_i32_0 = arith.constant 0 : i32
    return %c0_i32, %arg0 : i32, i32
  }
  func.func @transform_2(%arg0: i32) -> (i32, i32) {
    %c0_i32 = arith.constant 0 : i32
    %c0_i32_0 = arith.constant 0 : i32
    return %c0_i32, %arg0 : i32, i32
  }
}

</mosaic_0001>

<llo_original>
// kernel: tpu_custom_call.1
$region0: #{tpu_custom_call.1}
  #allocation0 [shape = 'u32[]', space=smem, size = 0x4, offset = 0x4, fixed_abs, tag = 'smem constant byte address 0x4 - core index']
  #allocation1 [shape = 'u32[72,128]{1,0:T(1,128)}', space=vmem, size = 0x9000, scoped, tag = 'internal scratch']
  %s0 = inlined_call_operand.hbm [shape: f32[8,16], index: 0, kind: input, shape index: {}]
  %s1 = inlined_call_operand.hbm [shape: f32[1,8], index: 1, kind: input, shape index: {}]
  %s2 = inlined_call_operand.hbm [shape: s32[1,8], index: 2, kind: output, shape index: {}]
  %s3 = sld [smem:[#allocation0]]
  $region26: #{tpu_custom_call.1} parent=0
    _
  %s5 = ssub.s32 1, %s3
  %s6 = scalar_select 0, %s5, %s3
  $region1: #{tpu_custom_call.1} parent=0
    #allocation2 [shape = 'u8[4096]{0}', space=vmem, size = 0x1000, scoped, tag = 'input window, operand 0, single buffered']
    #allocation3 [shape = 's32[1]{0}', space=sflag, size = 0x4, scoped, tag = 'scoped memory for tpu_custom_call.1']
    #allocation4 [shape = 's32[1]{0}', space=sflag, size = 0x4, scoped, tag = 'scoped memory for tpu_custom_call.1']
    #allocation5 [shape = 'u8[512]{0}', space=vmem, size = 0x400, scoped, tag = 'input window, operand 1, single buffered']
    #allocation6 [shape = 's32[1]{0}', space=sflag, size = 0x4, scoped, tag = 'scoped memory for tpu_custom_call.1']
    #allocation7 [shape = 'u8[512]{0}', space=vmem, size = 0x400, scoped, tag = 'output window, operand 0, single buffered']
    %7 = vsyncpa [#allocation3], 0
    %8 = vsyncpa [#allocation6], 0
    %9 = vsyncpa [#allocation4], 0
    // Predicated region
    $region2: #{tpu_custom_call.1} parent=1 // pred_check
      _
    $region3: #{tpu_custom_call.1} parent=1 // pred_check_branch
      %11 = sbr.rel (0) target = $region5
    $region4: #{tpu_custom_call.1} parent=1 // pred_region
      %13 = vsyncadd [#allocation3], 0
      %s15 = sshll.u32 %s0, 4
      %s16 = int_to_ptr.hbm [resolvable:$true] %s15
      %s17 = sshll.u32 [#allocation2], 4
      %s18 = int_to_ptr.vmem [resolvable:$true] %s17
      %20 = dma.hbm_to_vmem [thread:$0]  %s16, 128, %s18, [#allocation3]
    $region5: #{tpu_custom_call.1} parent=1 // pred_fallthru
      _
    // Predicated region
    $region6: #{tpu_custom_call.1} parent=1 // pred_check
      _
    $region7: #{tpu_custom_call.1} parent=1 // pred_check_branch
      %22 = sbr.rel (0) target = $region9
    $region8: #{tpu_custom_call.1} parent=1 // pred_region
      %24 = vsyncadd [#allocation6], 0
      %s26 = sshll.u32 %s1, 4
      %s27 = int_to_ptr.hbm [resolvable:$true] %s26
      %s28 = sshll.u32 [#allocation5], 4
      %s29 = int_to_ptr.vmem [resolvable:$true] %s28
      %31 = dma.hbm_to_vmem [thread:$0]  %s27, 16, %s29, [#allocation6]
    $region9: #{tpu_custom_call.1} parent=1 // pred_fallthru
      _
    // Predicated region
    $region10: #{tpu_custom_call.1} parent=1 // pred_check
      _
    $region11: #{tpu_custom_call.1} parent=1 // pred_check_branch
      %33 = sbr.rel (0) target = $region13
    $region12: #{tpu_custom_call.1} parent=1 // pred_region
      %35 = dma.done [#allocation3], 128
    $region13: #{tpu_custom_call.1} parent=1 // pred_fallthru
      _
    // Predicated region
    $region14: #{tpu_custom_call.1} parent=1 // pred_check
      _
    $region15: #{tpu_custom_call.1} parent=1 // pred_check_branch
      %37 = sbr.rel (0) target = $region17
    $region16: #{tpu_custom_call.1} parent=1 // pred_region
      %39 = dma.done [#allocation6], 16
    $region17: #{tpu_custom_call.1} parent=1 // pred_fallthru
      _
    %v40 = vld [vmem:[#allocation2] sm:$0xff]
    %v41 = vmul.f32 %v40, 0.5
    %vm42 = vcmask 130048
    %v43 = vsel %vm42, %v41, -inf
    %44 = vmax.xlane.f32.xlu0 %v43
    %v45 = vpop.xlane.xlu0 %44
    %v46 = vsub.f32 %v41, %v45
    %v47 = vmul.f32 %v46, 1.442695
    %v48 = vpow.pop %v47
    %v49 = vlaneseq
    %v50 = vshrl.u32 %v49, 7
    %v51 = vadd.s32 %v50, 8
    %v52 = vlaneseq
    %v53 = vand.u32 %v52, 127
    %vm54 = vcmp.le.s32.totalorder %v53, %v50
    %vm55 = vcmp.le.s32.totalorder %v53, %v51
    %v56 = vsel %vm54, 1, 0
    %v57 = vsel %vm55, 1, 0
    %v58 = vcvt.s32.f32 %v56
    %v59 = vcvt.s32.f32 %v57
    %v62 = vrot.slane %v58, 1
    %v63 = vrot.slane %v58, 2
    %v64 = vrot.slane %v58, 3
    %v65 = vrot.slane %v58, 4
    %v66 = vrot.slane %v58, 5
    %v67 = vrot.slane %v58, 6
    %v68 = vrot.slane %v58, 7
    %v69 = vrot.slane %v59, 1
    %v70 = vrot.slane %v59, 2
    %v71 = vrot.slane %v59, 3
    %v72 = vrot.slane %v59, 4
    %v73 = vrot.slane %v59, 5
    %v74 = vrot.slane %v59, 6
    %v75 = vrot.slane %v59, 7
    %v76 = vperm.slane %v58, 0
    %v77 = vperm.slane %v62, 0
    %v78 = vperm.slane %v63, 0
    %v79 = vperm.slane %v64, 0
    %v80 = vperm.slane %v65, 0
    %v81 = vperm.slane %v66, 0
    %v82 = vperm.slane %v67, 0
    %v83 = vperm.slane %v68, 0
    %v84 = vperm.slane %v59, 0
    %v85 = vperm.slane %v69, 0
    %v86 = vperm.slane %v70, 0
    %v87 = vperm.slane %v71, 0
    %v88 = vperm.slane %v72, 0
    %v89 = vperm.slane %v73, 0
    %v90 = vperm.slane %v74, 0
    %v91 = vperm.slane %v75, 0
    %v108 = vmul.f32 %v76, %v48
    %v109 = vmul.f32 %v77, %v48
    %v110 = vmul.f32 %v78, %v48
    %v111 = vmul.f32 %v79, %v48
    %v112 = vmul.f32 %v80, %v48
    %v113 = vmul.f32 %v81, %v48
    %v114 = vmul.f32 %v82, %v48
    %v115 = vmul.f32 %v83, %v48
    %v116 = vmul.f32 %v84, %v48
    %v117 = vmul.f32 %v85, %v48
    %v118 = vmul.f32 %v86, %v48
    %v119 = vmul.f32 %v87, %v48
    %v120 = vmul.f32 %v88, %v48
    %v121 = vmul.f32 %v89, %v48
    %v122 = vmul.f32 %v90, %v48
    %v123 = vmul.f32 %v91, %v48
    %v124 = vsel %vm42, %v108, 0.0
    %125 = vadd.xlane.f32.xlu0 %v124
    %v126 = vpop.xlane.xlu0 %125
    %v127 = vsel %vm42, %v109, 0.0
    %128 = vadd.xlane.f32.xlu0 %v127
    %v129 = vpop.xlane.xlu0 %128
    %v130 = vsel %vm42, %v110, 0.0
    %131 = vadd.xlane.f32.xlu0 %v130
    %v132 = vpop.xlane.xlu0 %131
    %v133 = vsel %vm42, %v111, 0.0
    %134 = vadd.xlane.f32.xlu0 %v133
    %v135 = vpop.xlane.xlu0 %134
    %v136 = vsel %vm42, %v112, 0.0
    %137 = vadd.xlane.f32.xlu0 %v136
    %v138 = vpop.xlane.xlu0 %137
    %v139 = vsel %vm42, %v113, 0.0
    %140 = vadd.xlane.f32.xlu0 %v139
    %v141 = vpop.xlane.xlu0 %140
    %v142 = vsel %vm42, %v114, 0.0
    %143 = vadd.xlane.f32.xlu0 %v142
    %v144 = vpop.xlane.xlu0 %143
    %v145 = vsel %vm42, %v115, 0.0
    %146 = vadd.xlane.f32.xlu0 %v145
    %v147 = vpop.xlane.xlu0 %146
    %v148 = vsel %vm42, %v116, 0.0
    %149 = vadd.xlane.f32.xlu0 %v148
    %v150 = vpop.xlane.xlu0 %149
    %v151 = vsel %vm42, %v117, 0.0
    %152 = vadd.xlane.f32.xlu0 %v151
    %v153 = vpop.xlane.xlu0 %152
    %v154 = vsel %vm42, %v118, 0.0
    %155 = vadd.xlane.f32.xlu0 %v154
    %v156 = vpop.xlane.xlu0 %155
    %v157 = vsel %vm42, %v119, 0.0
    %158 = vadd.xlane.f32.xlu0 %v157
    %v159 = vpop.xlane.xlu0 %158
    %v160 = vsel %vm42, %v120, 0.0
    %161 = vadd.xlane.f32.xlu0 %v160
    %v162 = vpop.xlane.xlu0 %161
    %v163 = vsel %vm42, %v121, 0.0
    %164 = vadd.xlane.f32.xlu0 %v163
    %v165 = vpop.xlane.xlu0 %164
    %v166 = vsel %vm42, %v122, 0.0
    %167 = vadd.xlane.f32.xlu0 %v166
    %v168 = vpop.xlane.xlu0 %167
    %v169 = vsel %vm42, %v123, 0.0
    %170 = vadd.xlane.f32.xlu0 %v169
    %v171 = vpop.xlane.xlu0 %170
    %v172 = vld [vmem:[#allocation5] sm:$0x1]
    %v174 = vperm.slane %v171, 0
    %v175 = vperm.slane %v171, 1
    %v176 = vperm.slane %v171, 2
    %v177 = vperm.slane %v171, 3
    %v178 = vperm.slane %v171, 4
    %v179 = vperm.slane %v171, 5
    %v180 = vperm.slane %v171, 6
    %v181 = vperm.slane %v171, 7
    %182 = vst [vmem:[#allocation1] ss:$9 sm:$0xff] %v174
    %s183 = scalar_lea.vmem [#allocation1], 1
    %184 = vst [vmem:[%s183] ss:$9 sm:$0xff] %v175
    %s185 = scalar_lea.vmem [#allocation1], 2
    %186 = vst [vmem:[%s185] ss:$9 sm:$0xff] %v176
    %s187 = scalar_lea.vmem [#allocation1], 3
    %188 = vst [vmem:[%s187] ss:$9 sm:$0xff] %v177
    %s189 = scalar_lea.vmem [#allocation1], 4
    %190 = vst [vmem:[%s189] ss:$9 sm:$0xff] %v178
    %s191 = scalar_lea.vmem [#allocation1], 5
    %192 = vst [vmem:[%s191] ss:$9 sm:$0xff] %v179
    %s193 = scalar_lea.vmem [#allocation1], 6
    %194 = vst [vmem:[%s193] ss:$9 sm:$0xff] %v180
    %s195 = scalar_lea.vmem [#allocation1], 7
    %196 = vst [vmem:[%s195] ss:$9 sm:$0xff] %v181
    %v197 = vld [vmem:[#allocation1] sm:$0xff]
    %198 = vset.pattern.permute.xlu0 0
    %199 = vperm.xlu0 %198, %v197
    %v200 = vpop.permute.xlu0 %199
    %v201 = vperm.slane %v200, %v53
    %v203 = vmul.f32 %v172, %v201
    %v205 = vperm.slane %v203, 0
    %v206 = vlaneseq
    %v207 = vshrl.u32 %v206, 7
    %209 = vset.pattern.permute.xlu0 %v207
    %210 = vperm.xlu0 %209, %v205
    %v211 = vpop.permute.xlu0 %210
    %vm213 = vcmp.lt.f32.partialorder %v126, %v211
    %vm214 = vcmp.lt.f32.partialorder %v129, %v211
    %vm215 = vcmp.lt.f32.partialorder %v132, %v211
    %vm216 = vcmp.lt.f32.partialorder %v135, %v211
    %vm217 = vcmp.lt.f32.partialorder %v138, %v211
    %vm218 = vcmp.lt.f32.partialorder %v141, %v211
    %vm219 = vcmp.lt.f32.partialorder %v144, %v211
    %vm220 = vcmp.lt.f32.partialorder %v147, %v211
    %vm221 = vcmp.lt.f32.partialorder %v150, %v211
    %vm222 = vcmp.lt.f32.partialorder %v153, %v211
    %vm223 = vcmp.lt.f32.partialorder %v156, %v211
    %vm224 = vcmp.lt.f32.partialorder %v159, %v211
    %vm225 = vcmp.lt.f32.partialorder %v162, %v211
    %vm226 = vcmp.lt.f32.partialorder %v165, %v211
    %vm227 = vcmp.lt.f32.partialorder %v168, %v211
    %vm228 = vcmp.lt.f32.partialorder %v171, %v211
    %v229 = vsel %vm213, 1, 0
    %v230 = vsel %vm214, 1, 0
    %v231 = vsel %vm215, 1, 0
    %v232 = vsel %vm216, 1, 0
    %v233 = vsel %vm217, 1, 0
    %v234 = vsel %vm218, 1, 0
    %v235 = vsel %vm219, 1, 0
    %v236 = vsel %vm220, 1, 0
    %v237 = vsel %vm221, 1, 0
    %v238 = vsel %vm222, 1, 0
    %v239 = vsel %vm223, 1, 0
    %v240 = vsel %vm224, 1, 0
    %v241 = vsel %vm225, 1, 0
    %v242 = vsel %vm226, 1, 0
    %v243 = vsel %vm227, 1, 0
    %v244 = vsel %vm228, 1, 0
    %vm245 = vcmask 7168
    %v246 = vsel %vm245, %v229, 0
    %v247 = vsel %vm245, %v230, 0
    %v248 = vsel %vm245, %v231, 0
    %v249 = vsel %vm245, %v232, 0
    %v250 = vsel %vm245, %v233, 0
    %v251 = vadd.s32 %v246, %v250
    %v252 = vsel %vm245, %v234, 0
    %v253 = vadd.s32 %v247, %v252
    %v254 = vsel %vm245, %v235, 0
    %v255 = vadd.s32 %v248, %v254
    %v256 = vsel %vm245, %v236, 0
    %v257 = vadd.s32 %v249, %v256
    %v258 = vsel %vm245, %v237, 0
    %v259 = vadd.s32 %v251, %v258
    %v260 = vsel %vm245, %v238, 0
    %v261 = vadd.s32 %v253, %v260
    %v262 = vsel %vm245, %v239, 0
    %v263 = vadd.s32 %v255, %v262
    %v264 = vsel %vm245, %v240, 0
    %v265 = vadd.s32 %v257, %v264
    %v266 = vsel %vm245, %v241, 0
    %v267 = vadd.s32 %v259, %v266
    %v268 = vsel %vm245, %v242, 0
    %v269 = vadd.s32 %v261, %v268
    %v270 = vsel %vm245, %v243, 0
    %v271 = vadd.s32 %v263, %v270
    %v272 = vsel %vm245, %v244, 0
    %v273 = vadd.s32 %v265, %v272
    %v274 = vadd.s32 %v267, %v269
    %v275 = vadd.s32 %v271, %v273
    %v276 = vadd.s32 %v274, %v275
    %vm277 = vcmp.lt.s32.totalorder %v276, 15
    %v278 = vsel %vm277, %v276, 15
    %279 = vset.pattern.permute.xlu0 0
    %280 = vperm.xlu0 %279, %v278
    %v281 = vpop.permute.xlu0 %280
    %v282 = vperm.slane %v281, %v53
    %vm283 = vcmask 57344
    %284 = vst.msk [vmem:[#allocation7] sm:$0x1] %vm283, %v282
    // Predicated region
    $region18: #{tpu_custom_call.1} parent=1 // pred_check
      _
    $region19: #{tpu_custom_call.1} parent=1 // pred_check_branch
      %286 = sbr.rel (0) target = $region21
    $region20: #{tpu_custom_call.1} parent=1 // pred_region
      %288 = vsyncadd [#allocation4], 0
      %s290 = sshll.u32 [#allocation7], 4
      %s291 = int_to_ptr.vmem [resolvable:$true] %s290
      %s292 = sshll.u32 %s2, 4
      %s293 = int_to_ptr.hbm [resolvable:$true] %s292
      %295 = dma.vmem_to_hbm [thread:$0]  %s291, 16, %s293, [#allocation4]
    $region21: #{tpu_custom_call.1} parent=1 // pred_fallthru
      _
    // Predicated region
    $region22: #{tpu_custom_call.1} parent=1 // pred_check
      _
    $region23: #{tpu_custom_call.1} parent=1 // pred_check_branch
      %297 = sbr.rel (0) target = $region25
    $region24: #{tpu_custom_call.1} parent=1 // pred_region
      %299 = dma.done [#allocation4], 16
    $region25: #{tpu_custom_call.1} parent=1 // pred_fallthru
      _
    %300 = vsyncpa [#allocation3], 1
    %301 = vsyncpa [#allocation6], 1
    %302 = vsyncpa [#allocation4], 1

</llo_original>
